<compile_context>
chip_gen: v7x
topology: tpu7x:2x2x1
jax: 0.10.0
libtpu: 0.0.40
codegen_flags: <defaults>
</compile_context>

<pallas_src>
import functools

import jax
import jax.numpy as jnp
from jax.experimental import pallas as pl
from jax.experimental.pallas import tpu as pltpu


def _round_up(n, m):
    return (n + m - 1) // m * m


def _slab_layout(n_feature, n_hidden, n_output):
    """Row offsets of each parameter section inside the packed slab.

    Sections start on sublane (8-row) boundaries; columns are padded to 128 lanes so
    the slab is a clean (8,128)-tiled VMEM block (one DMA descriptor).
    """
    r_w1 = 0                                    # w1^T : rows [0, F),       cols [0, H)
    r_b1 = _round_up(n_feature, 8)              # b1   : row  r_b1,         cols [0, H)
    r_w2 = r_b1 + 8                             # w2^T : rows [r_w2, +H),   cols [0, O)
    r_b2 = _round_up(r_w2 + n_hidden, 8)        # b2   : row  r_b2,         cols [0, O)
    rows = _round_up(r_b2 + 1, 8)
    cols = _round_up(max(n_hidden, n_output), 128)
    return r_w1, r_b1, r_w2, r_b2, rows, cols


def pack_params(w1, b1, w2, b2):
    """Pack torch-layout nn.Linear params into one lane-aligned f32 slab.

    Call ONCE at parameter creation / target-net sync time, NOT per forward call.
    w1: (H, F), b1: (H,), w2: (O, H), b2: (O,)   (torch layout, y = x @ W.T + b)
    Returns (slab, dims) with dims = (n_feature, n_hidden, n_output).
    Columns beyond each section's width stay zero, so the lane-padded 2nd matmul
    writes exact zeros in the padded output lanes.
    """
    n_hidden, n_feature = w1.shape
    n_output = w2.shape[0]
    r_w1, r_b1, r_w2, r_b2, rows, cols = _slab_layout(n_feature, n_hidden, n_output)

    slab = jnp.zeros((rows, cols), jnp.float32)
    slab = slab.at[r_w1:r_w1 + n_feature, :n_hidden].set(jnp.asarray(w1, jnp.float32).T)
    slab = slab.at[r_b1, :n_hidden].set(jnp.asarray(b1, jnp.float32))
    slab = slab.at[r_w2:r_w2 + n_hidden, :n_output].set(jnp.asarray(w2, jnp.float32).T)
    slab = slab.at[r_b2, :n_output].set(jnp.asarray(b2, jnp.float32))
    return slab, (n_feature, n_hidden, n_output)


def _net_kernel(x_ref, p_ref, o_ref, *, dims, offs):
    F, H, O = dims
    r_w1, r_b1, r_w2, r_b2 = offs

    x = x_ref[...]                               # (TB, F) f32
    w1 = p_ref[r_w1:r_w1 + F, :H]                # (F, H)   static slices of the slab
    b1 = p_ref[r_b1:r_b1 + 1, :H]                # (1, H)
    # Lane-dense second layer: use all 128 slab lanes (zero-padded beyond O) so the
    # output block is a full-lane store (no masked vst.msk / narrow writeback DMA).
    w2 = p_ref[r_w2:r_w2 + H, :]                 # (H, cols)
    b2 = p_ref[r_b2:r_b2 + 1, :]                 # (1, cols)

    # Linear 1 (MXU) + bias + ReLU (VPU), then Linear 2 (MXU) + bias.
    h = jnp.dot(x, w1, preferred_element_type=jnp.float32) + b1
    h = jnp.maximum(h, 0.0)
    o_ref[...] = jnp.dot(h, w2, preferred_element_type=jnp.float32) + b2


@functools.partial(jax.jit, static_argnames=("dims", "block_b"))
def net_forward(x, params, dims, block_b=4096):
    """x: (B, n_feature); params: slab from pack_params(); dims: (F, H, O)."""
    n_feature, n_hidden, n_output = dims
    r_w1, r_b1, r_w2, r_b2, rows, cols = _slab_layout(n_feature, n_hidden, n_output)

    if x.dtype != jnp.float32:
        x = x.astype(jnp.float32)

    B = x.shape[0]

    # Rollout / action-selection path: at B < 8 the work is a few hundred FLOPs and
    # pallas_call fixed overhead dominates — plain XLA is faster and identical math.
    if B < 8:
        w1 = params[r_w1:r_w1 + n_feature, :n_hidden]
        b1 = params[r_b1, :n_hidden]
        w2 = params[r_w2:r_w2 + n_hidden, :n_output]
        b2 = params[r_b2, :n_output]
        return jnp.maximum(x @ w1 + b1, 0.0) @ w2 + b2

    # Batch-tile selection: one grid step for typical replay batches; for very large
    # batches use an even, 256-aligned split so v7x's 2 TensorCores stay balanced.
    block_b = max(256, _round_up(int(block_b), 256))
    B8 = _round_up(B, 8)
    if B8 <= block_b:
        TB = B8                                   # single grid step, 8-aligned
    else:
        steps = pl.cdiv(B8, block_b)
        if steps % 2:
            steps += 1                            # even step count (v7x 2-TC split)
        TB = max(256, _round_up(pl.cdiv(B8, steps), 256))
    grid = pl.cdiv(B, TB)                         # partial last block handled by Pallas

    kernel = functools.partial(
        _net_kernel, dims=dims, offs=(r_w1, r_b1, r_w2, r_b2))

    flops = 2 * B * (n_feature * n_hidden + n_hidden * cols)
    bytes_accessed = 4 * (B * n_feature + B * cols + rows * cols)

    out = pl.pallas_call(
        kernel,
        out_shape=jax.ShapeDtypeStruct((B, cols), jnp.float32),   # lane-dense output
        grid=(grid,),
        in_specs=[
            pl.BlockSpec((TB, n_feature), lambda i: (i, 0)),      # batch tile of x
            pl.BlockSpec((rows, cols), lambda i: (0, 0)),         # whole param slab
        ],
        out_specs=pl.BlockSpec((TB, cols), lambda i: (i, 0)),
        compiler_params=pltpu.CompilerParams(
            dimension_semantics=("parallel",)),                   # megacore / v7x 2-TC
        cost_estimate=pl.CostEstimate(
            flops=flops, transcendentals=0, bytes_accessed=bytes_accessed),
    )(x, params)

    return out[:, :n_output]                      # strip zero-valued padded lanes


def _torch_linear_init(key, out_features, in_features):
    """Deterministic init mimicking nn.Linear default (uniform +/- 1/sqrt(in))."""
    kw, kb = jax.random.split(key)
    bound = 1.0 / jnp.sqrt(jnp.float32(in_features))
    w = jax.random.uniform(kw, (out_features, in_features), jnp.float32, -bound, bound)
    b = jax.random.uniform(kb, (out_features,), jnp.float32, -bound, bound)
    return w, b


if __name__ == "__main__":
    n_feature, n_hidden, n_output = 4, 32, 2     # CartPole-style DQN sizes

    key = jax.random.PRNGKey(0)
    k_x, k_l1, k_l2, k_x2 = jax.random.split(key, 4)

    w1, b1 = _torch_linear_init(k_l1, n_hidden, n_feature)
    w2, b2 = _torch_linear_init(k_l2, n_output, n_hidden)

    # One-time packing (parameter-creation time), outside the per-call hot path.
    params, dims = pack_params(w1, b1, w2, b2)

    def ref_fwd(xx):
        return jnp.maximum(xx @ w1.T + b1, 0.0) @ w2.T + b2

    # Exact-tile batch (single grid step).
    batch = 8
    x = jax.random.normal(k_x, (batch, n_feature), jnp.float32)
    out = jax.block_until_ready(net_forward(x, params, dims=dims))
    assert out.shape == (batch, n_output)
    assert jnp.allclose(out, ref_fwd(x), atol=1e-5, rtol=1e-5), "mismatch (B=8)"

    # Non-multiple-of-8 batch exercises the pad-free partial last block.
    batch2 = 20
    x2 = jax.random.normal(k_x2, (batch2, n_feature), jnp.float32)
    out2 = jax.block_until_ready(net_forward(x2, params, dims=dims))
    assert out2.shape == (batch2, n_output)
    assert jnp.allclose(out2, ref_fwd(x2), atol=1e-5, rtol=1e-5), "mismatch (B=20)"

    print("KERNEL_OK")
</pallas_src>

<mosaic_0001>
module attributes {stable_mosaic.version = 11 : i64} {
  func.func @_net_kernel(%arg0: i32, %arg1: memref<8x4xf32, #tpu.memory_space<vmem>>, %arg2: memref<56x128xf32, #tpu.memory_space<vmem>>, %arg3: memref<8x128xf32, #tpu.memory_space<vmem>>) attributes {dimension_semantics = [#tpu.dimension_semantics<parallel>], iteration_bounds = array<i64: 1>, scalar_prefetch = 0 : i64, scratch_operands = 0 : i64, tpu.core_type = #tpu.core_type<tc>, window_params = [{transform_indices = @transform_0, window_bounds = array<i64: 8, 4>}, {pipeline_mode = #tpu.pipeline_mode<synchronous>, transform_indices = @transform_1, window_bounds = array<i64: 56, 128>}, {transform_indices = @transform_2, window_bounds = array<i64: 8, 128>}]} {
    %c0 = arith.constant 0 : index
    %c0_0 = arith.constant 0 : index
    %0 = vector.load %arg1[%c0, %c0_0] : memref<8x4xf32, #tpu.memory_space<vmem>>, vector<8x4xf32>
    %c0_1 = arith.constant 0 : index
    %c0_2 = arith.constant 0 : index
    %1 = vector.load %arg2[%c0_1, %c0_2] : memref<56x128xf32, #tpu.memory_space<vmem>>, vector<4x32xf32>
    %c8 = arith.constant 8 : index
    %c0_3 = arith.constant 0 : index
    %2 = vector.load %arg2[%c8, %c0_3] : memref<56x128xf32, #tpu.memory_space<vmem>>, vector<1x32xf32>
    %c16 = arith.constant 16 : index
    %c0_4 = arith.constant 0 : index
    %3 = vector.load %arg2[%c16, %c0_4] : memref<56x128xf32, #tpu.memory_space<vmem>>, vector<32x128xf32>
    %c48 = arith.constant 48 : index
    %c0_5 = arith.constant 0 : index
    %4 = vector.load %arg2[%c48, %c0_5] : memref<56x128xf32, #tpu.memory_space<vmem>>, vector<1x128xf32>
    %cst = arith.constant dense<0.000000e+00> : vector<8x32xf32>
    %5 = tpu.matmul %0, %1, %cst {dimension_numbers = #tpu.dot_dimension_numbers<[1], [0], [0], [1], [0, 0, 1, 1], [], []>} : vector<8x4xf32>, vector<4x32xf32>, vector<8x32xf32> -> vector<8x32xf32>
    %6 = vector.broadcast %2 : vector<1x32xf32> to vector<8x32xf32>
    %7 = arith.addf %5, %6 : vector<8x32xf32>
    %cst_6 = arith.constant 0.000000e+00 : f32
    %8 = vector.broadcast %cst_6 : f32 to vector<8x32xf32>
    %9 = arith.maximumf %7, %8 : vector<8x32xf32>
    %cst_7 = arith.constant dense<0.000000e+00> : vector<8x128xf32>
    %10 = tpu.matmul %9, %3, %cst_7 {dimension_numbers = #tpu.dot_dimension_numbers<[1], [0], [0], [1], [0, 0, 1, 1], [], []>} : vector<8x32xf32>, vector<32x128xf32>, vector<8x128xf32> -> vector<8x128xf32>
    %11 = vector.broadcast %4 : vector<1x128xf32> to vector<8x128xf32>
    %12 = arith.addf %10, %11 : vector<8x128xf32>
    %c0_8 = arith.constant 0 : index
    %c0_9 = arith.constant 0 : index
    %13 = vector.load %arg3[%c0_8, %c0_9] : memref<8x128xf32, #tpu.memory_space<vmem>>, vector<8x128xf32>
    tpu.vector_store %arg3[%c0_8, %c0_9], %12 {strides = array<i32>} : memref<8x128xf32, #tpu.memory_space<vmem>>, vector<8x128xf32>,
    return
  }
  func.func @transform_0(%arg0: i32) -> (i32, i32) {
    %c0_i32 = arith.constant 0 : i32
    %c0_i32_0 = arith.constant 0 : i32
    return %arg0, %c0_i32 : i32, i32
  }
  func.func @transform_1(%arg0: i32) -> (i32, i32) {
    %c0_i32 = arith.constant 0 : i32
    %c0_i32_0 = arith.constant 0 : i32
    %c0_i32_1 = arith.constant 0 : i32
    return %c0_i32, %c0_i32_0 : i32, i32
  }
  func.func @transform_2(%arg0: i32) -> (i32, i32) {
    %c0_i32 = arith.constant 0 : i32
    %c0_i32_0 = arith.constant 0 : i32
    return %arg0, %c0_i32 : i32, i32
  }
}

</mosaic_0001>

<llo_original>
// kernel: net_forward.1
$region0: #{net_forward.1}
  #allocation0 [shape = 'u32[]', space=smem, size = 0x4, offset = 0x4, fixed_abs, tag = 'smem constant byte address 0x4 - core index']
  #allocation1 [shape = 'u32[144,128]{1,0:T(1,128)}', space=vmem, size = 0x12000, scoped, tag = 'internal scratch']
  %s0 = inlined_call_operand.vmem [shape: f32[8,4], index: 0, kind: input, shape index: {}]
  %s1 = inlined_call_operand.hbm [shape: f32[56,128], index: 1, kind: input, shape index: {}]
  %s2 = inlined_call_operand.vmem [shape: f32[8,128], index: 2, kind: output, shape index: {}]
  %s3 = sld [smem:[#allocation0]]
  $region22: #{net_forward.1} parent=0
    _
  %s5 = ssub.s32 1, %s3
  %s6 = scalar_select 0, %s5, %s3
  $region1: #{net_forward.1} parent=0
    #allocation2 [shape = 'u8[28672]{0}', space=vmem, size = 0x7000, scoped, tag = 'input window, operand 1, single buffered']
    #allocation3 [shape = 's32[1]{0}', space=sflag, size = 0x4, scoped, tag = 'scoped memory for net_forward.1']
    %7 = vsyncpa [#allocation3], 0
    // Predicated region
    $region2: #{net_forward.1} parent=1 // pred_check
      _
    $region3: #{net_forward.1} parent=1 // pred_check_branch
      %9 = sbr.rel (0) target = $region5
    $region4: #{net_forward.1} parent=1 // pred_region
      _
    $region5: #{net_forward.1} parent=1 // pred_fallthru
      _
    // Predicated region
    $region6: #{net_forward.1} parent=1 // pred_check
      _
    $region7: #{net_forward.1} parent=1 // pred_check_branch
      %11 = sbr.rel (0) target = $region9
    $region8: #{net_forward.1} parent=1 // pred_region
      %s13 = ssub.s32 896, 896
      %14 = vsyncadd [#allocation3], %s13
      %s15 = sshll.u32 [#allocation2], 4
      %s16 = int_to_ptr.vmem [resolvable:$true] %s15
      %21 = dma.hbm_to_vmem [thread:$0]  %s1, 896, %s16, [#allocation3], 128, 128, 8
    $region9: #{net_forward.1} parent=1 // pred_fallthru
      _
    // Predicated region
    $region10: #{net_forward.1} parent=1 // pred_check
      _
    $region11: #{net_forward.1} parent=1 // pred_check_branch
      %23 = sbr.rel (0) target = $region13
    $region12: #{net_forward.1} parent=1 // pred_region
      %24 = dma.done [#allocation3], 896
    $region13: #{net_forward.1} parent=1 // pred_fallthru
      _
    %v25 = vld [vmem:[%s0] sm:$0xff]
    %v26 = vld [vmem:[#allocation2] sm:$0xf]
    %v27 = vld [vmem:[#allocation2 + $0x8] sm:$0x1]
    %v28 = vld [vmem:[#allocation2 + $0x10] sm:$0xff]
    %v29 = vld [vmem:[#allocation2 + $0x18] sm:$0xff]
    %v30 = vld [vmem:[#allocation2 + $0x20] sm:$0xff]
    %v31 = vld [vmem:[#allocation2 + $0x28] sm:$0xff]
    %v32 = vld [vmem:[#allocation2 + $0x30] sm:$0x1]
    %v33 = vlaneseq
    %v34 = vshrl.u32 %v33, 7
    %v35 = vsub.s32 0, %v34
    %v36 = vrot.slane %v27, %v35
    %vm37 = vcmask 31744
    %v39 = vsel %vm37, %v25, 0
    %vm41 = vcmask 1043456
    %v43 = vsel %vm41, %v26, 0
    %45 = vmatprep.subr.mxu0 0.0
    %46 = vmatpush1.msra.mxu0 %v43
    %47 = vmatprep.subr.mxu0 0.0
    %48 = vmatpush1.msra.mxu0 0.0
    %49 = vmatprep.subr.mxu0 0.0
    %50 = vmatpush1.msra.mxu0 0.0
    %51 = vmatprep.subr.mxu0 0.0
    %52 = vmatpush1.msra.mxu0 0.0
    %53 = vmatprep.subr.mxu0 0.0
    %54 = vmatpush1.msra.mxu0 0.0
    %55 = vmatprep.subr.mxu0 0.0
    %56 = vmatpush1.msra.mxu0 0.0
    %57 = vmatprep.subr.mxu0 0.0
    %58 = vmatpush1.msra.mxu0 0.0
    %59 = vmatprep.subr.mxu0 0.0
    %60 = vmatpush1.msra.mxu0 0.0
    %61 = vmatprep.subr.mxu0 0.0
    %62 = vmatpush1.msra.mxu0 0.0
    %63 = vmatprep.subr.mxu0 0.0
    %64 = vmatpush1.msra.mxu0 0.0
    %65 = vmatprep.subr.mxu0 0.0
    %66 = vmatpush1.msra.mxu0 0.0
    %67 = vmatprep.subr.mxu0 0.0
    %68 = vmatpush1.msra.mxu0 0.0
    %69 = vmatprep.subr.mxu0 0.0
    %70 = vmatpush1.msra.mxu0 0.0
    %71 = vmatprep.subr.mxu0 0.0
    %72 = vmatpush1.msra.mxu0 0.0
    %73 = vmatprep.subr.mxu0 0.0
    %74 = vmatpush1.msra.mxu0 0.0
    %75 = vmatprep.subr.mxu0 0.0
    %76 = vmatpush1.msra.mxu0 0.0
    %77 = vmatprep.subr.mxu0 0.0
    %78 = vmatpush1.msra.mxu0 0.0
    %79 = vmatprep.subr.mxu0 0.0
    %80 = vmatpush1.msra.mxu0 0.0
    %81 = vmatprep.subr.mxu0 0.0
    %82 = vmatpush1.msra.mxu0 0.0
    %83 = vmatprep.subr.mxu0 0.0
    %84 = vmatpush1.msra.mxu0 0.0
    %85 = vmatprep.subr.mxu0 0.0
    %86 = vmatpush1.msra.mxu0 0.0
    %87 = vmatprep.subr.mxu0 0.0
    %88 = vmatpush1.msra.mxu0 0.0
    %89 = vmatprep.subr.mxu0 0.0
    %90 = vmatpush1.msra.mxu0 0.0
    %91 = vmatprep.subr.mxu0 0.0
    %92 = vmatpush1.msra.mxu0 0.0
    %93 = vmatprep.subr.mxu0 0.0
    %94 = vmatpush1.msra.mxu0 0.0
    %95 = vmatprep.subr.mxu0 0.0
    %96 = vmatpush1.msra.mxu0 0.0
    %97 = vmatprep.subr.mxu0 0.0
    %98 = vmatpush1.msra.mxu0 0.0
    %99 = vmatprep.subr.mxu0 0.0
    %100 = vmatpush1.msra.mxu0 0.0
    %101 = vmatprep.subr.mxu0 0.0
    %102 = vmatpush1.msra.mxu0 0.0
    %103 = vmatprep.subr.mxu0 0.0
    %104 = vmatpush1.msra.mxu0 0.0
    %105 = vmatprep.subr.mxu0 0.0
    %106 = vmatpush1.msra.mxu0 0.0
    %107 = vmatprep.subr.mxu0 0.0
    %108 = vmatpush1.msra.mxu0 0.0
    %109 = vmatprep.mubr.f32.mxu0 0.0
    %110 = vmatmul.mubr.f32.gmra.mrb[0].mxu0 %v39
    %v111 = vpop.f32.mrb[0].mxu0
    %v112 = vadd.f32 %v36, %v111
    %v113 = vpop.f32.mrb[0].mxu0
    %114 = vdwg.mxu0
    %v115 = vmax.f32 %v112, 0.0
    %v116 = vlaneseq
    %v117 = vshrl.u32 %v116, 7
    %v118 = vsub.s32 0, %v117
    %v119 = vrot.slane %v32, %v118
    %vm120 = vcmask 261120
    %v122 = vsel %vm120, %v115, 0
    %124 = vmatprep.subr.mxu0 0.0
    %125 = vmatpush1.msra.mxu0 %v28
    %126 = vmatprep.subr.mxu0 0.0
    %127 = vmatpush1.msra.mxu0 %v29
    %128 = vmatprep.subr.mxu0 0.0
    %129 = vmatpush1.msra.mxu0 %v30
    %130 = vmatprep.subr.mxu0 0.0
    %131 = vmatpush1.msra.mxu0 %v31
    %132 = vmatprep.subr.mxu0 0.0
    %133 = vmatpush1.msra.mxu0 0.0
    %134 = vmatprep.subr.mxu0 0.0
    %135 = vmatpush1.msra.mxu0 0.0
    %136 = vmatprep.subr.mxu0 0.0
    %137 = vmatpush1.msra.mxu0 0.0
    %138 = vmatprep.subr.mxu0 0.0
    %139 = vmatpush1.msra.mxu0 0.0
    %140 = vmatprep.subr.mxu0 0.0
    %141 = vmatpush1.msra.mxu0 0.0
    %142 = vmatprep.subr.mxu0 0.0
    %143 = vmatpush1.msra.mxu0 0.0
    %144 = vmatprep.subr.mxu0 0.0
    %145 = vmatpush1.msra.mxu0 0.0
    %146 = vmatprep.subr.mxu0 0.0
    %147 = vmatpush1.msra.mxu0 0.0
    %148 = vmatprep.subr.mxu0 0.0
    %149 = vmatpush1.msra.mxu0 0.0
    %150 = vmatprep.subr.mxu0 0.0
    %151 = vmatpush1.msra.mxu0 0.0
    %152 = vmatprep.subr.mxu0 0.0
    %153 = vmatpush1.msra.mxu0 0.0
    %154 = vmatprep.subr.mxu0 0.0
    %155 = vmatpush1.msra.mxu0 0.0
    %156 = vmatprep.subr.mxu0 0.0
    %157 = vmatpush1.msra.mxu0 0.0
    %158 = vmatprep.subr.mxu0 0.0
    %159 = vmatpush1.msra.mxu0 0.0
    %160 = vmatprep.subr.mxu0 0.0
    %161 = vmatpush1.msra.mxu0 0.0
    %162 = vmatprep.subr.mxu0 0.0
    %163 = vmatpush1.msra.mxu0 0.0
    %164 = vmatprep.subr.mxu0 0.0
    %165 = vmatpush1.msra.mxu0 0.0
    %166 = vmatprep.subr.mxu0 0.0
    %167 = vmatpush1.msra.mxu0 0.0
    %168 = vmatprep.subr.mxu0 0.0
    %169 = vmatpush1.msra.mxu0 0.0
    %170 = vmatprep.subr.mxu0 0.0
    %171 = vmatpush1.msra.mxu0 0.0
    %172 = vmatprep.subr.mxu0 0.0
    %173 = vmatpush1.msra.mxu0 0.0
    %174 = vmatprep.subr.mxu0 0.0
    %175 = vmatpush1.msra.mxu0 0.0
    %176 = vmatprep.subr.mxu0 0.0
    %177 = vmatpush1.msra.mxu0 0.0
    %178 = vmatprep.subr.mxu0 0.0
    %179 = vmatpush1.msra.mxu0 0.0
    %180 = vmatprep.subr.mxu0 0.0
    %181 = vmatpush1.msra.mxu0 0.0
    %182 = vmatprep.subr.mxu0 0.0
    %183 = vmatpush1.msra.mxu0 0.0
    %184 = vmatprep.subr.mxu0 0.0
    %185 = vmatpush1.msra.mxu0 0.0
    %186 = vmatprep.subr.mxu0 0.0
    %187 = vmatpush1.msra.mxu0 0.0
    %188 = vmatprep.mubr.f32.mxu0 0.0
    %189 = vmatmul.mubr.f32.gmra.mrb[0].mxu0 %v122
    %v190 = vpop.f32.mrb[0].mxu0
    %v191 = vadd.f32 %v119, %v190
    %v192 = vpop.f32.mrb[0].mxu0
    %193 = vdwg.mxu0
    %194 = vst [vmem:[%s2] sm:$0xff] %v191
    // Predicated region
    $region14: #{net_forward.1} parent=1 // pred_check
      _
    $region15: #{net_forward.1} parent=1 // pred_check_branch
      %196 = sbr.rel (0) target = $region17
    $region16: #{net_forward.1} parent=1 // pred_region
      _
    $region17: #{net_forward.1} parent=1 // pred_fallthru
      _
    // Predicated region
    $region18: #{net_forward.1} parent=1 // pred_check
      _
    $region19: #{net_forward.1} parent=1 // pred_check_branch
      %198 = sbr.rel (0) target = $region21
    $region20: #{net_forward.1} parent=1 // pred_region
      _
    $region21: #{net_forward.1} parent=1 // pred_fallthru
      _
    %199 = vsyncpa [#allocation3], 1

</llo_original>
